<compile_context>
chip_gen: v7x
topology: tpu7x:2x2x1
jax: 0.10.0
libtpu: 0.0.40
codegen_flags: <defaults>
</compile_context>

<pallas_src>
import jax
import jax.numpy as jnp
from jax.experimental import pallas as pl
from jax.experimental.pallas import tpu as pltpu

IN_DIM = 256   # fused-feature width
H1 = 128       # layer-1 width per head
H2 = 64        # layer-2 width per head
OUT_COLS = 8   # packed output columns (0:2 policy, 2 value, 3:8 padding)


def decision_kernel(x_ref, w1_ref, w2_ref, w3_ref, b_ref, out_ref):
    x = x_ref[...]                                   # (TB, 256) compute dtype

    b1 = b_ref[0:1, :]                               # (1, 256) f32
    b2 = b_ref[1:2, 0:2 * H2]                        # (1, 128) f32
    b3 = b_ref[2:3, 0:OUT_COLS]                      # (1,   8) f32

    # Layer 1 (fused policy||value): (TB,256) @ (256,256) -> (TB,256)
    h = jnp.dot(x, w1_ref[...], preferred_element_type=jnp.float32) + b1
    h = jnp.maximum(h, 0.0)

    # Layer 2 (block-diagonal): (TB,256) @ (256,128) -> (TB,128)
    h = jnp.dot(h.astype(w2_ref.dtype), w2_ref[...],
                preferred_element_type=jnp.float32) + b2
    h = jnp.maximum(h, 0.0)

    # Layer 3 (packed heads): (TB,128) @ (128,8) -> (TB,8)
    out = jnp.dot(h.astype(w3_ref.dtype), w3_ref[...],
                  preferred_element_type=jnp.float32) + b3
    out_ref[...] = out.astype(out_ref.dtype)


def pack_params(params, compute_dtype=jnp.bfloat16):
    """Fuse the 12 per-layer tensors into 3 weight slabs + 1 bias slab.

    Call ONCE at init (or under the same jit) and reuse the result; doing this
    per forward call would relaunch the re-layout ops every step.
    """
    (pw1, pb1, pw2, pb2, pw3, pb3,
     vw1, vb1, vw2, vb2, vw3, vb3) = params

    # Layer 1: concat along out dim -> (256, 256)
    w1 = jnp.concatenate([pw1, vw1], axis=1)

    # Layer 2: block-diagonal (256, 128)
    w2 = jnp.zeros((2 * H1, 2 * H2), jnp.float32)
    w2 = w2.at[:H1, :H2].set(pw2).at[H1:, H2:].set(vw2)

    # Layer 3: (128, 8); cols 0:2 <- policy, col 2 <- value, rest zero
    w3 = jnp.zeros((2 * H2, OUT_COLS), jnp.float32)
    w3 = w3.at[:H2, 0:2].set(pw3).at[H2:, 2:3].set(vw3)

    # Packed biases (8, 256): row0 = [pb1|vb1], row1[:128] = [pb2|vb2],
    # row2[:8] = packed layer-3 bias.  Remaining rows/cols are padding.
    b = jnp.zeros((8, IN_DIM), jnp.float32)
    b = b.at[0, :].set(jnp.concatenate([pb1, vb1], axis=1)[0])
    b = b.at[1, :2 * H2].set(jnp.concatenate([pb2, vb2], axis=1)[0])
    b3 = jnp.zeros((OUT_COLS,), jnp.float32).at[0:2].set(pb3[0]).at[2].set(vb3[0, 0])
    b = b.at[2, :OUT_COLS].set(b3)

    return (w1.astype(compute_dtype), w2.astype(compute_dtype),
            w3.astype(compute_dtype), b)


def _round_up(x, m):
    return ((x + m - 1) // m) * m


def _select_batch_tile(B, batch_tile):
    """Lane/MXU-friendly tile: multiple of 128, >=2 grid steps when possible."""
    tb = max(128, (batch_tile // 128) * 128)
    tb = min(tb, _round_up(B, 128))               # never larger than the batch
    if B > 128:
        # cap at ~ceil(B/2) so dimension_semantics=("parallel",) can shard the
        # grid across both TensorCores on v7x
        tb = min(tb, _round_up(-(-B // 2), 128))
    return tb


def decision_forward(x, packed, *, batch_tile=1024, vmem_limit_bytes=None):
    """Fused policy/value forward.

    x:       (B, 256), ideally already in the packed-weight compute dtype.
    packed:  output of pack_params().
    Returns (policy (B, 2) f32, value (B, 1) f32).
    """
    w1, w2, w3, b = packed
    B, D = x.shape
    assert D == IN_DIM

    if x.dtype != w1.dtype:
        # Prefer producers that emit x in the compute dtype; under jit this
        # cast fuses upstream, otherwise it is an extra HBM pass over x.
        x = x.astype(w1.dtype)

    tb = _select_batch_tile(B, batch_tile)
    grid = (pl.cdiv(B, tb),)   # ragged tail handled by Pallas boundary blocks

    cp_kwargs = dict(dimension_semantics=("parallel",))
    if vmem_limit_bytes is not None:
        cp_kwargs["vmem_limit_bytes"] = vmem_limit_bytes

    out = pl.pallas_call(
        decision_kernel,
        out_shape=jax.ShapeDtypeStruct((B, OUT_COLS), jnp.float32),
        grid_spec=pltpu.PrefetchScalarGridSpec(
            num_scalar_prefetch=0,
            grid=grid,
            in_specs=[
                pl.BlockSpec((tb, IN_DIM), lambda i: (i, 0)),        # x (streamed)
                pl.BlockSpec((IN_DIM, 2 * H1), lambda i: (0, 0)),    # fused W1 (resident)
                pl.BlockSpec((2 * H1, 2 * H2), lambda i: (0, 0)),    # block-diag W2
                pl.BlockSpec((2 * H2, OUT_COLS), lambda i: (0, 0)),  # packed W3
                pl.BlockSpec((8, IN_DIM), lambda i: (0, 0)),         # packed biases
            ],
            out_specs=pl.BlockSpec((tb, OUT_COLS), lambda i: (i, 0)),
        ),
        compiler_params=pltpu.CompilerParams(**cp_kwargs),
    )(x, w1, w2, w3, b)

    policy = out[:, 0:2]
    value = out[:, 2:3]
    return policy, value


def init_params(key):
    """Deterministic init; weights stored as (in, out), biases as (1, out)."""
    def linear(key, fan_in, fan_out):
        kw, kb = jax.random.split(key)
        bound = 1.0 / jnp.sqrt(fan_in)
        w = jax.random.uniform(kw, (fan_in, fan_out), jnp.float32, -bound, bound)
        b = jax.random.uniform(kb, (1, fan_out), jnp.float32, -bound, bound)
        return w, b

    keys = jax.random.split(key, 6)
    pw1, pb1 = linear(keys[0], 256, 128)
    pw2, pb2 = linear(keys[1], 128, 64)
    pw3, pb3 = linear(keys[2], 64, 2)
    vw1, vb1 = linear(keys[3], 256, 128)
    vw2, vb2 = linear(keys[4], 128, 64)
    vw3, vb3 = linear(keys[5], 64, 1)
    return (pw1, pb1, pw2, pb2, pw3, pb3,
            vw1, vb1, vw2, vb2, vw3, vb3)


def reference(x, params):
    (pw1, pb1, pw2, pb2, pw3, pb3,
     vw1, vb1, vw2, vb2, vw3, vb3) = params
    h = jnp.maximum(x @ pw1 + pb1, 0.0)
    h = jnp.maximum(h @ pw2 + pb2, 0.0)
    policy = h @ pw3 + pb3
    g = jnp.maximum(x @ vw1 + vb1, 0.0)
    g = jnp.maximum(g @ vw2 + vb2, 0.0)
    value = g @ vw3 + vb3
    return policy, value


if __name__ == "__main__":
    key = jax.random.PRNGKey(0)
    kx, kp = jax.random.split(key)

    # Deliberately ragged batch: exercises the pad-free boundary-block path and
    # (via the tile cap) a 2-step "parallel" grid so both v7x TCs get work.
    B = 200
    x = jax.random.normal(kx, (B, 256), jnp.float32)
    params = init_params(kp)
    ref_p, ref_v = reference(x, params)

    fwd = jax.jit(decision_forward, static_argnames=("batch_tile", "vmem_limit_bytes"))

    # f32 compute path.  Tolerance accounts for XLA-default vs Mosaic matmul
    # precision differences on f32 operands (both use the MXU).
    packed_f32 = pack_params(params, jnp.float32)
    policy, value = fwd(x, packed_f32)
    jax.block_until_ready((policy, value))
    assert policy.shape == (B, 2) and value.shape == (B, 1)
    assert jnp.allclose(policy, ref_p, atol=1e-2, rtol=1e-2)
    assert jnp.allclose(value, ref_v, atol=1e-2, rtol=1e-2)

    # bf16 operand path (default for production): producer hands bf16 x, so the
    # wrapper performs no cast; MXU accumulation and epilogue stay f32.
    packed_bf16 = pack_params(params, jnp.bfloat16)
    x_bf16 = x.astype(jnp.bfloat16)
    policy_bf, value_bf = fwd(x_bf16, packed_bf16)
    jax.block_until_ready((policy_bf, value_bf))
    assert jnp.allclose(policy_bf, ref_p, atol=5e-2, rtol=5e-2)
    assert jnp.allclose(value_bf, ref_v, atol=5e-2, rtol=5e-2)

    print("KERNEL_OK")
</pallas_src>

<mosaic_0001>
module attributes {stable_mosaic.version = 11 : i64} {
  func.func @decision_kernel(%arg0: i32, %arg1: memref<128x256xf32, #tpu.memory_space<vmem>>, %arg2: memref<256x256xf32, #tpu.memory_space<vmem>>, %arg3: memref<256x128xf32, #tpu.memory_space<vmem>>, %arg4: memref<128x8xf32, #tpu.memory_space<vmem>>, %arg5: memref<8x256xf32, #tpu.memory_space<vmem>>, %arg6: memref<128x8xf32, #tpu.memory_space<vmem>>) attributes {dimension_semantics = [#tpu.dimension_semantics<parallel>], iteration_bounds = array<i64: 2>, scalar_prefetch = 0 : i64, scratch_operands = 0 : i64, tpu.core_type = #tpu.core_type<tc>, window_params = [{transform_indices = @transform_0, window_bounds = array<i64: 128, 256>}, {pipeline_mode = #tpu.pipeline_mode<synchronous>, transform_indices = @transform_1, window_bounds = array<i64: 256, 256>}, {pipeline_mode = #tpu.pipeline_mode<synchronous>, transform_indices = @transform_2, window_bounds = array<i64: 256, 128>}, {pipeline_mode = #tpu.pipeline_mode<synchronous>, transform_indices = @transform_3, window_bounds = array<i64: 128, 8>}, {pipeline_mode = #tpu.pipeline_mode<synchronous>, transform_indices = @transform_4, window_bounds = array<i64: 8, 256>}, {transform_indices = @transform_5, window_bounds = array<i64: 128, 8>}]} {
    %c0 = arith.constant 0 : index
    %c0_0 = arith.constant 0 : index
    %0 = vector.load %arg1[%c0, %c0_0] : memref<128x256xf32, #tpu.memory_space<vmem>>, vector<128x256xf32>
    %c0_1 = arith.constant 0 : index
    %c0_2 = arith.constant 0 : index
    %1 = vector.load %arg5[%c0_1, %c0_2] : memref<8x256xf32, #tpu.memory_space<vmem>>, vector<1x256xf32>
    %c1 = arith.constant 1 : index
    %c0_3 = arith.constant 0 : index
    %2 = vector.load %arg5[%c1, %c0_3] : memref<8x256xf32, #tpu.memory_space<vmem>>, vector<1x128xf32>
    %c2 = arith.constant 2 : index
    %c0_4 = arith.constant 0 : index
    %3 = vector.load %arg5[%c2, %c0_4] : memref<8x256xf32, #tpu.memory_space<vmem>>, vector<1x8xf32>
    %c0_5 = arith.constant 0 : index
    %c0_6 = arith.constant 0 : index
    %4 = vector.load %arg2[%c0_5, %c0_6] : memref<256x256xf32, #tpu.memory_space<vmem>>, vector<256x256xf32>
    %cst = arith.constant dense<0.000000e+00> : vector<128x256xf32>
    %5 = tpu.matmul %0, %4, %cst {dimension_numbers = #tpu.dot_dimension_numbers<[1], [0], [0], [1], [0, 0, 1, 1], [], []>} : vector<128x256xf32>, vector<256x256xf32>, vector<128x256xf32> -> vector<128x256xf32>
    %6 = vector.broadcast %1 : vector<1x256xf32> to vector<128x256xf32>
    %7 = arith.addf %5, %6 : vector<128x256xf32>
    %cst_7 = arith.constant 0.000000e+00 : f32
    %8 = vector.broadcast %cst_7 : f32 to vector<128x256xf32>
    %9 = arith.maximumf %7, %8 : vector<128x256xf32>
    %c0_8 = arith.constant 0 : index
    %c0_9 = arith.constant 0 : index
    %10 = vector.load %arg3[%c0_8, %c0_9] : memref<256x128xf32, #tpu.memory_space<vmem>>, vector<256x128xf32>
    %cst_10 = arith.constant dense<0.000000e+00> : vector<128x128xf32>
    %11 = tpu.matmul %9, %10, %cst_10 {dimension_numbers = #tpu.dot_dimension_numbers<[1], [0], [0], [1], [0, 0, 1, 1], [], []>} : vector<128x256xf32>, vector<256x128xf32>, vector<128x128xf32> -> vector<128x128xf32>
    %12 = vector.broadcast %2 : vector<1x128xf32> to vector<128x128xf32>
    %13 = arith.addf %11, %12 : vector<128x128xf32>
    %cst_11 = arith.constant 0.000000e+00 : f32
    %14 = vector.broadcast %cst_11 : f32 to vector<128x128xf32>
    %15 = arith.maximumf %13, %14 : vector<128x128xf32>
    %c0_12 = arith.constant 0 : index
    %c0_13 = arith.constant 0 : index
    %16 = vector.load %arg4[%c0_12, %c0_13] : memref<128x8xf32, #tpu.memory_space<vmem>>, vector<128x8xf32>
    %cst_14 = arith.constant dense<0.000000e+00> : vector<128x8xf32>
    %17 = tpu.matmul %15, %16, %cst_14 {dimension_numbers = #tpu.dot_dimension_numbers<[1], [0], [0], [1], [0, 0, 1, 1], [], []>} : vector<128x128xf32>, vector<128x8xf32>, vector<128x8xf32> -> vector<128x8xf32>
    %18 = vector.broadcast %3 : vector<1x8xf32> to vector<128x8xf32>
    %19 = arith.addf %17, %18 : vector<128x8xf32>
    %c0_15 = arith.constant 0 : index
    %c0_16 = arith.constant 0 : index
    %20 = vector.load %arg6[%c0_15, %c0_16] : memref<128x8xf32, #tpu.memory_space<vmem>>, vector<128x8xf32>
    tpu.vector_store %arg6[%c0_15, %c0_16], %19 {strides = array<i32>} : memref<128x8xf32, #tpu.memory_space<vmem>>, vector<128x8xf32>,
    return
  }
  func.func @transform_0(%arg0: i32) -> (i32, i32) {
    %c0_i32 = arith.constant 0 : i32
    %c0_i32_0 = arith.constant 0 : i32
    return %arg0, %c0_i32 : i32, i32
  }
  func.func @transform_1(%arg0: i32) -> (i32, i32) {
    %c0_i32 = arith.constant 0 : i32
    %c0_i32_0 = arith.constant 0 : i32
    %c0_i32_1 = arith.constant 0 : i32
    return %c0_i32, %c0_i32_0 : i32, i32
  }
  func.func @transform_2(%arg0: i32) -> (i32, i32) {
    %c0_i32 = arith.constant 0 : i32
    %c0_i32_0 = arith.constant 0 : i32
    %c0_i32_1 = arith.constant 0 : i32
    return %c0_i32, %c0_i32_0 : i32, i32
  }
  func.func @transform_3(%arg0: i32) -> (i32, i32) {
    %c0_i32 = arith.constant 0 : i32
    %c0_i32_0 = arith.constant 0 : i32
    %c0_i32_1 = arith.constant 0 : i32
    return %c0_i32, %c0_i32_0 : i32, i32
  }
  func.func @transform_4(%arg0: i32) -> (i32, i32) {
    %c0_i32 = arith.constant 0 : i32
    %c0_i32_0 = arith.constant 0 : i32
    %c0_i32_1 = arith.constant 0 : i32
    return %c0_i32, %c0_i32_0 : i32, i32
  }
  func.func @transform_5(%arg0: i32) -> (i32, i32) {
    %c0_i32 = arith.constant 0 : i32
    %c0_i32_0 = arith.constant 0 : i32
    return %arg0, %c0_i32 : i32, i32
  }
}

</mosaic_0001>

<llo_original>
// kernel: decision_forward.1
$region0: #{decision_forward.1}
  #allocation0 [shape = 'u32[]', space=smem, size = 0x4, offset = 0x4, fixed_abs, tag = 'smem constant byte address 0x4 - core index']
  #allocation1 [shape = 'u32[144,128]{1,0:T(1,128)}', space=vmem, size = 0x12000, scoped, tag = 'internal scratch']
  %s0 = inlined_call_operand.hbm [shape: f32[200,256], index: 0, kind: input, shape index: {}]
  %s1 = inlined_call_operand.hbm [shape: f32[256,256], index: 1, kind: input, shape index: {}]
  %s2 = inlined_call_operand.hbm [shape: f32[256,128], index: 2, kind: input, shape index: {}]
  %s3 = inlined_call_operand.vmem [shape: f32[128,8], index: 3, kind: input, shape index: {}]
  %s4 = inlined_call_operand.vmem [shape: f32[8,256], index: 4, kind: input, shape index: {}]
  %s5 = inlined_call_operand.vmem [shape: f32[200,8], index: 5, kind: output, shape index: {}]
  %s6 = sld [smem:[#allocation0]]
  $region113: #{decision_forward.1} parent=0
    _
  %s8 = ssub.s32 1, %s6
  %s9 = scalar_select 0, %s8, %s6
  $region1: #{decision_forward.1} parent=0
    #allocation2 [shape = 'u8[262144]{0}', space=vmem, size = 0x40000, scoped, tag = 'input window, operand 0']
    #allocation3 [shape = 's32[2]{0}', space=sflag, size = 0x8, scoped, tag = 'scoped memory for decision_forward.1']
    #allocation4 [shape = 'u8[262144]{0}', space=vmem, size = 0x40000, scoped, tag = 'input window, operand 1, single buffered']
    #allocation5 [shape = 's32[1]{0}', space=sflag, size = 0x4, scoped, tag = 'scoped memory for decision_forward.1']
    #allocation6 [shape = 'u8[131072]{0}', space=vmem, size = 0x20000, scoped, tag = 'input window, operand 2, single buffered']
    #allocation7 [shape = 'u8[131072]{0}', space=vmem, size = 0x20000, scoped, tag = 'output window, operand 0']
    %10 = vsyncpa [#allocation3], 0
    %s11 = scalar_lea.sflag [#allocation3], 1
    %12 = vsyncpa %s11, 0
    %13 = vsyncpa [#allocation5], 0
    loop: start=0, step=1, limit=4
    $region2: #{decision_forward.1} parent=1 // loop_pre_header
      _
    $region3: #{decision_forward.1} parent=1 // loop_header
      %s15 = sphi 0, %s19
      %p16 = scmp.ge.s32.totalorder %s15, 4
      %s25 = sphi 0, %s27
      %s28 = sphi 0, %s25
      %s29 = sphi 0, %s28
      %s45 = sphi 0, %s29
      %s49 = sphi 0, %s49
      %s51 = sphi 0, %s49
      %s52 = sphi 0, %s51
      %s66 = sphi 0, %s52
      %s70 = sphi 0, %s70
      %s72 = sphi 0, %s70
      %s73 = sphi 0, %s72
      %s87 = sphi 0, %s73
      %s91 = sphi 0, %s91
      %s93 = sphi 0, %s91
      %s94 = sphi 0, %s93
      %s108 = sphi 0, %s94
      %s112 = sphi 0, %s112
      %s114 = sphi 0, %s112
      %s115 = sphi 0, %s114
      %s129 = sphi 0, %s115
      %s135 = sphi 0, %s137
      %s138 = sphi 0, %s135
      %s139 = sphi 0, %s138
      %s155 = sphi 0, %s139
    $region4: #{decision_forward.1} parent=1 // loop_header_branch
      %18 = sbr.rel (%p16) target = $region8
    $region5: #{decision_forward.1} parent=1 // loop_body
      %s20 = ssub.s32 %s15, 1
      %s21 = ssub.s32 %s15, 2
      %s22 = sadd.s32 %s15, 1
      %s23 = ssub.s32 %s15, %s22
      %p24 = scmp.eq.s32.totalorder %s23, 0
      %s26 = sadd.s32 %s25, 1
      %s27 = scalar_select %p24, %s25, %s26
      %p30 = pneg %p24
      %p31 = scmp.eq.s32.totalorder %s15, 1
      %p32 = por %p30, %p31
      %p33 = scmp.ne.s32.totalorder %s25, %s28
      %p34 = scmp.eq.s32.totalorder %s15, 0
      %p35 = por %p33, %p34
      %p36 = scmp.ne.s32.totalorder %s25, %s28
      %p37 = scmp.eq.s32.totalorder %s20, 1
      %p38 = por %p36, %p37
      %p39 = scmp.ne.s32.totalorder %s28, %s29
      %p40 = scmp.eq.s32.totalorder %s20, 0
      %p41 = por %p39, %p40
      %p42 = scmp.ne.s32.totalorder %s28, %s29
      %p43 = scmp.eq.s32.totalorder %s21, 1
      %p44 = por %p42, %p43
      %p46 = scmp.ne.s32.totalorder %s29, %s45
      %p47 = scmp.eq.s32.totalorder %s21, 0
      %p48 = por %p46, %p47
      %s50 = sadd.s32 %s49, 1
      %p53 = scmp.eq.s32.totalorder %s15, 1
      %p54 = scmp.ne.s32.totalorder %s49, %s51
      %p55 = scmp.eq.s32.totalorder %s15, 0
      %p56 = por %p54, %p55
      %p57 = scmp.ne.s32.totalorder %s49, %s51
      %p58 = scmp.eq.s32.totalorder %s20, 1
      %p59 = por %p57, %p58
      %p60 = scmp.ne.s32.totalorder %s51, %s52
      %p61 = scmp.eq.s32.totalorder %s20, 0
      %p62 = por %p60, %p61
      %p63 = scmp.ne.s32.totalorder %s51, %s52
      %p64 = scmp.eq.s32.totalorder %s21, 1
      %p65 = por %p63, %p64
      %p67 = scmp.ne.s32.totalorder %s52, %s66
      %p68 = scmp.eq.s32.totalorder %s21, 0
      %p69 = por %p67, %p68
      %s71 = sadd.s32 %s70, 1
      %p74 = scmp.eq.s32.totalorder %s15, 1
      %p75 = scmp.ne.s32.totalorder %s70, %s72
      %p76 = scmp.eq.s32.totalorder %s15, 0
      %p77 = por %p75, %p76
      %p78 = scmp.ne.s32.totalorder %s70, %s72
      %p79 = scmp.eq.s32.totalorder %s20, 1
      %p80 = por %p78, %p79
      %p81 = scmp.ne.s32.totalorder %s72, %s73
      %p82 = scmp.eq.s32.totalorder %s20, 0
      %p83 = por %p81, %p82
      %p84 = scmp.ne.s32.totalorder %s72, %s73
      %p85 = scmp.eq.s32.totalorder %s21, 1
      %p86 = por %p84, %p85
      %p88 = scmp.ne.s32.totalorder %s73, %s87
      %p89 = scmp.eq.s32.totalorder %s21, 0
      %p90 = por %p88, %p89
      %s92 = sadd.s32 %s91, 1
      %p95 = scmp.eq.s32.totalorder %s15, 1
      %p96 = scmp.ne.s32.totalorder %s91, %s93
      %p97 = scmp.eq.s32.totalorder %s15, 0
      %p98 = por %p96, %p97
      %p99 = scmp.ne.s32.totalorder %s91, %s93
      %p100 = scmp.eq.s32.totalorder %s20, 1
      %p101 = por %p99, %p100
      %p102 = scmp.ne.s32.totalorder %s93, %s94
      %p103 = scmp.eq.s32.totalorder %s20, 0
      %p104 = por %p102, %p103
      %p105 = scmp.ne.s32.totalorder %s93, %s94
      %p106 = scmp.eq.s32.totalorder %s21, 1
      %p107 = por %p105, %p106
      %p109 = scmp.ne.s32.totalorder %s94, %s108
      %p110 = scmp.eq.s32.totalorder %s21, 0
      %p111 = por %p109, %p110
      %s113 = sadd.s32 %s112, 1
      %p116 = scmp.eq.s32.totalorder %s15, 1
      %p117 = scmp.ne.s32.totalorder %s112, %s114
      %p118 = scmp.eq.s32.totalorder %s15, 0
      %p119 = por %p117, %p118
      %p120 = scmp.ne.s32.totalorder %s112, %s114
      %p121 = scmp.eq.s32.totalorder %s20, 1
      %p122 = por %p120, %p121
      %p123 = scmp.ne.s32.totalorder %s114, %s115
      %p124 = scmp.eq.s32.totalorder %s20, 0
      %p125 = por %p123, %p124
      %p126 = scmp.ne.s32.totalorder %s114, %s115
      %p127 = scmp.eq.s32.totalorder %s21, 1
      %p128 = por %p126, %p127
      %p130 = scmp.ne.s32.totalorder %s115, %s129
      %p131 = scmp.eq.s32.totalorder %s21, 0
      %p132 = por %p130, %p131
      %s133 = ssub.s32 %s15, %s22
      %p134 = scmp.eq.s32.totalorder %s133, 0
      %s136 = sadd.s32 %s135, 1
      %s137 = scalar_select %p134, %s135, %s136
      %p140 = pneg %p134
      %p141 = scmp.eq.s32.totalorder %s15, 1
      %p142 = por %p140, %p141
      %p143 = scmp.ne.s32.totalorder %s135, %s138
      %p144 = scmp.eq.s32.totalorder %s15, 0
      %p145 = por %p143, %p144
      %p146 = scmp.ne.s32.totalorder %s135, %s138
      %p147 = scmp.eq.s32.totalorder %s20, 1
      %p148 = por %p146, %p147
      %p149 = scmp.ne.s32.totalorder %s138, %s139
      %p150 = scmp.eq.s32.totalorder %s20, 0
      %p151 = por %p149, %p150
      %p152 = scmp.ne.s32.totalorder %s138, %s139
      %p153 = scmp.eq.s32.totalorder %s21, 1
      %p154 = por %p152, %p153
      %p156 = scmp.ne.s32.totalorder %s139, %s155
      %p157 = scmp.eq.s32.totalorder %s21, 0
      %p158 = por %p156, %p157
      %p159 = scmp.le.s32.totalorder 1, %s15
      %p160 = scmp.lt.s32.totalorder %s15, 3
      %p161 = pnand %p159, %p160
      %p162 = pneg %p161
      // Predicated region
      $region9: #{decision_forward.1} parent=5 // pred_check
        _
      $region10: #{decision_forward.1} parent=5 // pred_check_branch
        %164 = sbr.rel (%p161) target = $region12
      $region11: #{decision_forward.1} parent=5 // pred_region
        %s165 = ssub.s32 %s15, 1
        // Predicated region
        $region13: #{decision_forward.1} parent=11 // pred_check
          %p166 = pneg %p62
        $region14: #{decision_forward.1} parent=11 // pred_check_branch
          %168 = sbr.rel (%p166) target = $region16
        $region15: #{decision_forward.1} parent=11 // pred_region
          %s170 = ssub.s32 8192, 8192
          %171 = vsyncadd [#allocation5], %s170
          %s172 = sshll.u32 [#allocation4], 4
          %s173 = int_to_ptr.vmem [resolvable:$true] %s172
          %178 = dma.hbm_to_vmem [thread:$0]  %s1, 8192, %s173, [#allocation5], 256, 256, 16
        $region16: #{decision_forward.1} parent=11 // pred_fallthru
          _
        // Predicated region
        $region17: #{decision_forward.1} parent=11 // pred_check
          %p179 = pneg %p83
        $region18: #{decision_forward.1} parent=11 // pred_check_branch
          %181 = sbr.rel (%p179) target = $region20
        $region19: #{decision_forward.1} parent=11 // pred_region
          %s183 = ssub.s32 4096, 4096
          %184 = vsyncadd [#allocation5], %s183
          %s185 = sshll.u32 [#allocation6], 4
          %s186 = int_to_ptr.vmem [resolvable:$true] %s185
          %191 = dma.hbm_to_vmem [thread:$0]  %s2, 4096, %s186, [#allocation5], 128, 128, 8
        $region20: #{decision_forward.1} parent=11 // pred_fallthru
          _
        // Predicated region
        $region21: #{decision_forward.1} parent=11 // pred_check
          %p192 = pneg %p104
        $region22: #{decision_forward.1} parent=11 // pred_check_branch
          %194 = sbr.rel (%p192) target = $region24
        $region23: #{decision_forward.1} parent=11 // pred_region
          _
        $region24: #{decision_forward.1} parent=11 // pred_fallthru
          _
        // Predicated region
        $region25: #{decision_forward.1} parent=11 // pred_check
          %p195 = pneg %p125
        $region26: #{decision_forward.1} parent=11 // pred_check_branch
          %197 = sbr.rel (%p195) target = $region28
        $region27: #{decision_forward.1} parent=11 // pred_region
          _
        $region28: #{decision_forward.1} parent=11 // pred_fallthru
          _
      $region12: #{decision_forward.1} parent=5 // pred_fallthru
        _
      %p198 = scmp.lt.s32.totalorder %s15, 2
      // Predicated region
      $region29: #{decision_forward.1} parent=5 // pred_check
        %p199 = pneg %p198
      $region30: #{decision_forward.1} parent=5 // pred_check_branch
        %201 = sbr.rel (%p199) target = $region32
      $region31: #{decision_forward.1} parent=5 // pred_region
        // Predicated region
        $region33: #{decision_forward.1} parent=31 // pred_check
          %p202 = pneg %p35
        $region34: #{decision_forward.1} parent=31 // pred_check_branch
          %204 = sbr.rel (%p202) target = $region36
        $region35: #{decision_forward.1} parent=31 // pred_region
          %s205 = sand.u32 %s25, 1
          %s206 = scalar_lea.sflag [#allocation3], %s205
          %s207 = sand.u32 %s25, 1
          %s208 = smul.addr %s207, 256
          %s209 = scalar_lea.vmem [#allocation2], %s208
          %s210 = smul.u32 16, %s15
          %s211 = ssub.s32 25, %s210
          %p212 = scmp.lt.s32.totalorder %s211, 16
          %s213 = scalar_select %p212, %s211, 16
          %s214 = smul.u32 128, %s213
          %s215 = smul.u32 %s214, 2
          %s217 = ssub.s32 4096, %s215
          %218 = vsyncadd %s206, %s217
          %p219 = scmp.ne.s32.totalorder 0, %s215
          %s220 = smul.addr %s210, 2
          %s221 = smul.addr %s220, 128
          %s222 = scalar_lea.hbm %s0, %s221
          %s223 = smul.u32 16, %s213
          %s224 = sshll.u32 %s209, 4
          %s225 = int_to_ptr.vmem [resolvable:$true] %s224
          %s226 = sshll.u32 %s223, 4
          %230 = dma.hbm_to_vmem [thread:$0]  (%p219), %s222, %s226, %s225, %s206, 256, 256, 16
        $region36: #{decision_forward.1} parent=31 // pred_fallthru
          _
      $region32: #{decision_forward.1} parent=5 // pred_fallthru
        _
      %p231 = scmp.le.s32.totalorder 1, %s15
      %p232 = scmp.lt.s32.totalorder %s15, 3
      %p233 = pnand %p231, %p232
      %p234 = pneg %p233
      // Predicated region
      $region37: #{decision_forward.1} parent=5 // pred_check
        _
      $region38: #{decision_forward.1} parent=5 // pred_check_branch
        %236 = sbr.rel (%p233) target = $region40
      $region39: #{decision_forward.1} parent=5 // pred_region
        %s237 = ssub.s32 %s15, 1
        %s238 = sand.u32 %s28, 1
        %s239 = scalar_lea.sflag [#allocation3], %s238
        %s240 = sand.u32 %s28, 1
        %s241 = smul.addr %s240, 256
        %s242 = scalar_lea.vmem [#allocation2], %s241
        // Predicated region
        $region41: #{decision_forward.1} parent=39 // pred_check
          %p243 = pneg %p41
        $region42: #{decision_forward.1} parent=39 // pred_check_branch
          %245 = sbr.rel (%p243) target = $region44
        $region43: #{decision_forward.1} parent=39 // pred_region
          %246 = dma.done %s239, 4096
        $region44: #{decision_forward.1} parent=39 // pred_fallthru
          _
        // Predicated region
        $region45: #{decision_forward.1} parent=39 // pred_check
          %p247 = pneg %p62
        $region46: #{decision_forward.1} parent=39 // pred_check_branch
          %249 = sbr.rel (%p247) target = $region48
        $region47: #{decision_forward.1} parent=39 // pred_region
          %250 = dma.done [#allocation5], 8192
        $region48: #{decision_forward.1} parent=39 // pred_fallthru
          _
        // Predicated region
        $region49: #{decision_forward.1} parent=39 // pred_check
          %p251 = pneg %p83
        $region50: #{decision_forward.1} parent=39 // pred_check_branch
          %253 = sbr.rel (%p251) target = $region52
        $region51: #{decision_forward.1} parent=39 // pred_region
          %254 = dma.done [#allocation5], 4096
        $region52: #{decision_forward.1} parent=39 // pred_fallthru
          _
        %s255 = sand.u32 %s28, 1
        %s256 = scalar_lea.sflag [#allocation3], %s255
        %s257 = sand.u32 %s28, 1
        %s258 = smul.addr %s257, 256
        %s259 = scalar_lea.vmem [#allocation2], %s258
        %p260 = pneg %p41
        %p261 = pneg %p38
        %p262 = pneg %p62
        %p263 = pneg %p59
        %p264 = pneg %p83
        %p265 = pneg %p80
        %p266 = pneg %p104
        %p267 = pneg %p101
        %p268 = pneg %p125
        %p269 = pneg %p122
        %p270 = pneg %p151
        %p271 = pneg %p148
        %s272 = sand.u32 %s138, 1
        %s273 = sand.u32 %s138, 1
        %s274 = smul.addr %s273, 128
        %s275 = scalar_lea.vmem [#allocation7], %s274
        %s276 = smul.u32 16, %s20
        %s277 = ssub.s32 25, %s276
        %p278 = scmp.lt.s32.totalorder %s277, 16
        %s279 = scalar_select %p278, %s277, 16
        %s280 = smul.u32 128, %s279
        %s281 = smul.u32 %s280, 2
        %s282 = smul.u32 16, %s20
        %s283 = ssub.s32 25, %s282
        %p284 = scmp.lt.s32.totalorder %s283, 16
        %s285 = scalar_select %p284, %s283, 16
        %s286 = smul.u32 128, %s285
        %v287 = vld [vmem:[%s242] sm:$0xff]
        %v288 = vld [vmem:[%s242 + $0x8] sm:$0xff]
        %v289 = vld [vmem:[%s242 + $0x10] sm:$0xff]
        %v290 = vld [vmem:[%s242 + $0x18] sm:$0xff]
        %v291 = vld [vmem:[%s242 + $0x20] sm:$0xff]
        %v292 = vld [vmem:[%s242 + $0x28] sm:$0xff]
        %v293 = vld [vmem:[%s242 + $0x30] sm:$0xff]
        %v294 = vld [vmem:[%s242 + $0x38] sm:$0xff]
        %v295 = vld [vmem:[%s242 + $0x40] sm:$0xff]
        %v296 = vld [vmem:[%s242 + $0x48] sm:$0xff]
        %v297 = vld [vmem:[%s242 + $0x50] sm:$0xff]
        %v298 = vld [vmem:[%s242 + $0x58] sm:$0xff]
        %v299 = vld [vmem:[%s242 + $0x60] sm:$0xff]
        %v300 = vld [vmem:[%s242 + $0x68] sm:$0xff]
        %v301 = vld [vmem:[%s242 + $0x70] sm:$0xff]
        %v302 = vld [vmem:[%s242 + $0x78] sm:$0xff]
        %v303 = vld [vmem:[%s242 + $0x80] sm:$0xff]
        %v304 = vld [vmem:[%s242 + $0x88] sm:$0xff]
        %v305 = vld [vmem:[%s242 + $0x90] sm:$0xff]
        %v306 = vld [vmem:[%s242 + $0x98] sm:$0xff]
        %v307 = vld [vmem:[%s242 + $0xa0] sm:$0xff]
        %v308 = vld [vmem:[%s242 + $0xa8] sm:$0xff]
        %v309 = vld [vmem:[%s242 + $0xb0] sm:$0xff]
        %v310 = vld [vmem:[%s242 + $0xb8] sm:$0xff]
        %v311 = vld [vmem:[%s242 + $0xc0] sm:$0xff]
        %v312 = vld [vmem:[%s242 + $0xc8] sm:$0xff]
        %v313 = vld [vmem:[%s242 + $0xd0] sm:$0xff]
        %v314 = vld [vmem:[%s242 + $0xd8] sm:$0xff]
        %v315 = vld [vmem:[%s242 + $0xe0] sm:$0xff]
        %v316 = vld [vmem:[%s242 + $0xe8] sm:$0xff]
        %v317 = vld [vmem:[%s242 + $0xf0] sm:$0xff]
        %v318 = vld [vmem:[%s242 + $0xf8] sm:$0xff]
        %v319 = vld [vmem:[%s4] ss:$8 sm:$0x3]
        %v320 = vld [vmem:[%s4 + $0x1] ss:$0 sm:$0xff]
        %v321 = vld [vmem:[%s4 + $0x2] ss:$0 sm:$0xff]
        %v322 = vld [vmem:[#allocation4] sm:$0xff]
        %v323 = vld [vmem:[#allocation4 + $0x8] sm:$0xff]
        %v324 = vld [vmem:[#allocation4 + $0x10] sm:$0xff]
        %v325 = vld [vmem:[#allocation4 + $0x18] sm:$0xff]
        %v326 = vld [vmem:[#allocation4 + $0x20] sm:$0xff]
        %v327 = vld [vmem:[#allocation4 + $0x28] sm:$0xff]
        %v328 = vld [vmem:[#allocation4 + $0x30] sm:$0xff]
        %v329 = vld [vmem:[#allocation4 + $0x38] sm:$0xff]
        %v330 = vld [vmem:[#allocation4 + $0x40] sm:$0xff]
        %v331 = vld [vmem:[#allocation4 + $0x48] sm:$0xff]
        %v332 = vld [vmem:[#allocation4 + $0x50] sm:$0xff]
        %v333 = vld [vmem:[#allocation4 + $0x58] sm:$0xff]
        %v334 = vld [vmem:[#allocation4 + $0x60] sm:$0xff]
        %v335 = vld [vmem:[#allocation4 + $0x68] sm:$0xff]
        %v336 = vld [vmem:[#allocation4 + $0x70] sm:$0xff]
        %v337 = vld [vmem:[#allocation4 + $0x78] sm:$0xff]
        %v338 = vld [vmem:[#allocation4 + $0x80] sm:$0xff]
        %v339 = vld [vmem:[#allocation4 + $0x88] sm:$0xff]
        %v340 = vld [vmem:[#allocation4 + $0x90] sm:$0xff]
        %v341 = vld [vmem:[#allocation4 + $0x98] sm:$0xff]
        %v342 = vld [vmem:[#allocation4 + $0xa0] sm:$0xff]
        %v343 = vld [vmem:[#allocation4 + $0xa8] sm:$0xff]
        %v344 = vld [vmem:[#allocation4 + $0xb0] sm:$0xff]
        %v345 = vld [vmem:[#allocation4 + $0xb8] sm:$0xff]
        %v346 = vld [vmem:[#allocation4 + $0xc0] sm:$0xff]
        %v347 = vld [vmem:[#allocation4 + $0xc8] sm:$0xff]
        %v348 = vld [vmem:[#allocation4 + $0xd0] sm:$0xff]
        %v349 = vld [vmem:[#allocation4 + $0xd8] sm:$0xff]
        %v350 = vld [vmem:[#allocation4 + $0xe0] sm:$0xff]
        %v351 = vld [vmem:[#allocation4 + $0xe8] sm:$0xff]
        %v352 = vld [vmem:[#allocation4 + $0xf0] sm:$0xff]
        %v353 = vld [vmem:[#allocation4 + $0xf8] sm:$0xff]
        %v354 = vld [vmem:[#allocation4 + $0x100] sm:$0xff]
        %v355 = vld [vmem:[#allocation4 + $0x108] sm:$0xff]
        %v356 = vld [vmem:[#allocation4 + $0x110] sm:$0xff]
        %v357 = vld [vmem:[#allocation4 + $0x118] sm:$0xff]
        %v358 = vld [vmem:[#allocation4 + $0x120] sm:$0xff]
        %v359 = vld [vmem:[#allocation4 + $0x128] sm:$0xff]
        %v360 = vld [vmem:[#allocation4 + $0x130] sm:$0xff]
        %v361 = vld [vmem:[#allocation4 + $0x138] sm:$0xff]
        %v362 = vld [vmem:[#allocation4 + $0x140] sm:$0xff]
        %v363 = vld [vmem:[#allocation4 + $0x148] sm:$0xff]
        %v364 = vld [vmem:[#allocation4 + $0x150] sm:$0xff]
        %v365 = vld [vmem:[#allocation4 + $0x158] sm:$0xff]
        %v366 = vld [vmem:[#allocation4 + $0x160] sm:$0xff]
        %v367 = vld [vmem:[#allocation4 + $0x168] sm:$0xff]
        %v368 = vld [vmem:[#allocation4 + $0x170] sm:$0xff]
        %v369 = vld [vmem:[#allocation4 + $0x178] sm:$0xff]
        %v370 = vld [vmem:[#allocation4 + $0x180] sm:$0xff]
        %v371 = vld [vmem:[#allocation4 + $0x188] sm:$0xff]
        %v372 = vld [vmem:[#allocation4 + $0x190] sm:$0xff]
        %v373 = vld [vmem:[#allocation4 + $0x198] sm:$0xff]
        %v374 = vld [vmem:[#allocation4 + $0x1a0] sm:$0xff]
        %v375 = vld [vmem:[#allocation4 + $0x1a8] sm:$0xff]
        %v376 = vld [vmem:[#allocation4 + $0x1b0] sm:$0xff]
        %v377 = vld [vmem:[#allocation4 + $0x1b8] sm:$0xff]
        %v378 = vld [vmem:[#allocation4 + $0x1c0] sm:$0xff]
        %v379 = vld [vmem:[#allocation4 + $0x1c8] sm:$0xff]
        %v380 = vld [vmem:[#allocation4 + $0x1d0] sm:$0xff]
        %v381 = vld [vmem:[#allocation4 + $0x1d8] sm:$0xff]
        %v382 = vld [vmem:[#allocation4 + $0x1e0] sm:$0xff]
        %v383 = vld [vmem:[#allocation4 + $0x1e8] sm:$0xff]
        %v384 = vld [vmem:[#allocation4 + $0x1f0] sm:$0xff]
        %v385 = vld [vmem:[#allocation4 + $0x1f8] sm:$0xff]
        %v387 = vlaneseq
        %v388 = vshrl.u32 %v387, 7
        %v389 = vsub.s32 0, %v388
        %v390 = vrot.slane %v319, %v389
        %v391 = vlaneseq
        %v392 = vshrl.u32 %v391, 7
        %v393 = vsub.s32 1, %v392
        %v394 = vrot.slane %v319, %v393
        %397 = vmatprep.subr.mxu0 %v323
        %398 = vmatpush1.msra.mxu0 %v322
        %399 = vmatprep.subr.mxu0 %v325
        %400 = vmatpush1.msra.mxu0 %v324
        %401 = vmatprep.subr.mxu0 %v327
        %402 = vmatpush1.msra.mxu0 %v326
        %403 = vmatprep.subr.mxu0 %v329
        %404 = vmatpush1.msra.mxu0 %v328
        %405 = vmatprep.subr.mxu0 %v331
        %406 = vmatpush1.msra.mxu0 %v330
        %407 = vmatprep.subr.mxu0 %v333
        %408 = vmatpush1.msra.mxu0 %v332
        %409 = vmatprep.subr.mxu0 %v335
        %410 = vmatpush1.msra.mxu0 %v334
        %411 = vmatprep.subr.mxu0 %v337
        %412 = vmatpush1.msra.mxu0 %v336
        %413 = vmatprep.subr.mxu0 %v339
        %414 = vmatpush1.msra.mxu0 %v338
        %415 = vmatprep.subr.mxu0 %v341
        %416 = vmatpush1.msra.mxu0 %v340
        %417 = vmatprep.subr.mxu0 %v343
        %418 = vmatpush1.msra.mxu0 %v342
        %419 = vmatprep.subr.mxu0 %v345
        %420 = vmatpush1.msra.mxu0 %v344
        %421 = vmatprep.subr.mxu0 %v347
        %422 = vmatpush1.msra.mxu0 %v346
        %423 = vmatprep.subr.mxu0 %v349
        %424 = vmatpush1.msra.mxu0 %v348
        %425 = vmatprep.subr.mxu0 %v351
        %426 = vmatpush1.msra.mxu0 %v350
        %427 = vmatprep.subr.mxu0 %v353
        %428 = vmatpush1.msra.mxu0 %v352
        %429 = vmatprep.subr.mxu0 %v355
        %430 = vmatpush1.msra.mxu0 %v354
        %431 = vmatprep.subr.mxu0 %v357
        %432 = vmatpush1.msra.mxu0 %v356
        %433 = vmatprep.subr.mxu0 %v359
        %434 = vmatpush1.msra.mxu0 %v358
        %435 = vmatprep.subr.mxu0 %v361
        %436 = vmatpush1.msra.mxu0 %v360
        %437 = vmatprep.subr.mxu0 %v363
        %438 = vmatpush1.msra.mxu0 %v362
        %439 = vmatprep.subr.mxu0 %v365
        %440 = vmatpush1.msra.mxu0 %v364
        %441 = vmatprep.subr.mxu0 %v367
        %442 = vmatpush1.msra.mxu0 %v366
        %443 = vmatprep.subr.mxu0 %v369
        %444 = vmatpush1.msra.mxu0 %v368
        %445 = vmatprep.subr.mxu0 %v371
        %446 = vmatpush1.msra.mxu0 %v370
        %447 = vmatprep.subr.mxu0 %v373
        %448 = vmatpush1.msra.mxu0 %v372
        %449 = vmatprep.subr.mxu0 %v375
        %450 = vmatpush1.msra.mxu0 %v374
        %451 = vmatprep.subr.mxu0 %v377
        %452 = vmatpush1.msra.mxu0 %v376
        %453 = vmatprep.subr.mxu0 %v379
        %454 = vmatpush1.msra.mxu0 %v378
        %455 = vmatprep.subr.mxu0 %v381
        %456 = vmatpush1.msra.mxu0 %v380
        %457 = vmatprep.subr.mxu0 %v383
        %458 = vmatpush1.msra.mxu0 %v382
        %459 = vmatprep.subr.mxu0 %v385
        %460 = vmatpush1.msra.mxu0 %v384
        %461 = vmatprep.mubr.f32.mxu0 %v288
        %462 = vmatmul.mubr.f32.gmra.mrb[0].mxu0 %v287
        %v463 = vpop.f32.mrb[0].mxu0
        %v464 = vadd.f32 %v390, %v463
        %v465 = vpop.f32.mrb[0].mxu0
        %v466 = vadd.f32 %v394, %v465
        %467 = vmatprep.mubr.f32.mxu0 %v290
        %468 = vmatmul.mubr.f32.gmra.mrb[0].mxu0 %v289
        %v469 = vpop.f32.mrb[0].mxu0
        %v470 = vadd.f32 %v390, %v469
        %v471 = vpop.f32.mrb[0].mxu0
        %v472 = vadd.f32 %v394, %v471
        %473 = vmatprep.mubr.f32.mxu0 %v292
        %474 = vmatmul.mubr.f32.gmra.mrb[0].mxu0 %v291
        %v475 = vpop.f32.mrb[0].mxu0
        %v476 = vadd.f32 %v390, %v475
        %v477 = vpop.f32.mrb[0].mxu0
        %v478 = vadd.f32 %v394, %v477
        %479 = vmatprep.mubr.f32.mxu0 %v294
        %480 = vmatmul.mubr.f32.gmra.mrb[0].mxu0 %v293
        %v481 = vpop.f32.mrb[0].mxu0
        %v482 = vadd.f32 %v390, %v481
        %v483 = vpop.f32.mrb[0].mxu0
        %v484 = vadd.f32 %v394, %v483
        %485 = vmatprep.mubr.f32.mxu0 %v296
        %486 = vmatmul.mubr.f32.gmra.mrb[0].mxu0 %v295
        %v487 = vpop.f32.mrb[0].mxu0
        %v488 = vadd.f32 %v390, %v487
        %v489 = vpop.f32.mrb[0].mxu0
        %v490 = vadd.f32 %v394, %v489
        %491 = vmatprep.mubr.f32.mxu0 %v298
        %492 = vmatmul.mubr.f32.gmra.mrb[0].mxu0 %v297
        %v493 = vpop.f32.mrb[0].mxu0
        %v494 = vadd.f32 %v390, %v493
        %v495 = vpop.f32.mrb[0].mxu0
        %v496 = vadd.f32 %v394, %v495
        %497 = vmatprep.mubr.f32.mxu0 %v300
        %498 = vmatmul.mubr.f32.gmra.mrb[0].mxu0 %v299
        %v499 = vpop.f32.mrb[0].mxu0
        %v500 = vadd.f32 %v390, %v499
        %v501 = vpop.f32.mrb[0].mxu0
        %v502 = vadd.f32 %v394, %v501
        %503 = vmatprep.mubr.f32.mxu0 %v302
        %504 = vmatmul.mubr.f32.gmra.mrb[0].mxu0 %v301
        %v505 = vpop.f32.mrb[0].mxu0
        %v506 = vadd.f32 %v390, %v505
        %v507 = vpop.f32.mrb[0].mxu0
        %v508 = vadd.f32 %v394, %v507
        %509 = vmatprep.mubr.f32.mxu0 %v304
        %510 = vmatmul.mubr.f32.gmra.mrb[0].mxu0 %v303
        %v511 = vpop.f32.mrb[0].mxu0
        %v512 = vadd.f32 %v390, %v511
        %v513 = vpop.f32.mrb[0].mxu0
        %v514 = vadd.f32 %v394, %v513
        %515 = vmatprep.mubr.f32.mxu0 %v306
        %516 = vmatmul.mubr.f32.gmra.mrb[0].mxu0 %v305
        %v517 = vpop.f32.mrb[0].mxu0
        %v518 = vadd.f32 %v390, %v517
        %v519 = vpop.f32.mrb[0].mxu0
        %v520 = vadd.f32 %v394, %v519
        %521 = vmatprep.mubr.f32.mxu0 %v308
        %522 = vmatmul.mubr.f32.gmra.mrb[0].mxu0 %v307
        %v523 = vpop.f32.mrb[0].mxu0
        %v524 = vadd.f32 %v390, %v523
        %v525 = vpop.f32.mrb[0].mxu0
        %v526 = vadd.f32 %v394, %v525
        %527 = vmatprep.mubr.f32.mxu0 %v310
        %528 = vmatmul.mubr.f32.gmra.mrb[0].mxu0 %v309
        %v529 = vpop.f32.mrb[0].mxu0
        %v530 = vadd.f32 %v390, %v529
        %v531 = vpop.f32.mrb[0].mxu0
        %v532 = vadd.f32 %v394, %v531
        %533 = vmatprep.mubr.f32.mxu0 %v312
        %534 = vmatmul.mubr.f32.gmra.mrb[0].mxu0 %v311
        %v535 = vpop.f32.mrb[0].mxu0
        %v536 = vadd.f32 %v390, %v535
        %v537 = vpop.f32.mrb[0].mxu0
        %v538 = vadd.f32 %v394, %v537
        %539 = vmatprep.mubr.f32.mxu0 %v314
        %540 = vmatmul.mubr.f32.gmra.mrb[0].mxu0 %v313
        %v541 = vpop.f32.mrb[0].mxu0
        %v542 = vadd.f32 %v390, %v541
        %v543 = vpop.f32.mrb[0].mxu0
        %v544 = vadd.f32 %v394, %v543
        %545 = vmatprep.mubr.f32.mxu0 %v316
        %546 = vmatmul.mubr.f32.gmra.mrb[0].mxu0 %v315
        %v547 = vpop.f32.mrb[0].mxu0
        %v548 = vadd.f32 %v390, %v547
        %v549 = vpop.f32.mrb[0].mxu0
        %v550 = vadd.f32 %v394, %v549
        %551 = vmatprep.mubr.f32.mxu0 %v318
        %552 = vmatmul.mubr.f32.gmra.mrb[0].mxu0 %v317
        %v553 = vpop.f32.mrb[0].mxu0
        %v554 = vadd.f32 %v390, %v553
        %v555 = vpop.f32.mrb[0].mxu0
        %v556 = vadd.f32 %v394, %v555
        %557 = vdwg.mxu0
        %v558 = vmax.f32 %v464, 0.0
        %v559 = vmax.f32 %v466, 0.0
        %v560 = vmax.f32 %v470, 0.0
        %v561 = vmax.f32 %v472, 0.0
        %v562 = vmax.f32 %v476, 0.0
        %v563 = vmax.f32 %v478, 0.0
        %v564 = vmax.f32 %v482, 0.0
        %v565 = vmax.f32 %v484, 0.0
        %v566 = vmax.f32 %v488, 0.0
        %v567 = vmax.f32 %v490, 0.0
        %v568 = vmax.f32 %v494, 0.0
        %v569 = vmax.f32 %v496, 0.0
        %v570 = vmax.f32 %v500, 0.0
        %v571 = vmax.f32 %v502, 0.0
        %v572 = vmax.f32 %v506, 0.0
        %v573 = vmax.f32 %v508, 0.0
        %v574 = vmax.f32 %v512, 0.0
        %v575 = vmax.f32 %v514, 0.0
        %v576 = vmax.f32 %v518, 0.0
        %v577 = vmax.f32 %v520, 0.0
        %v578 = vmax.f32 %v524, 0.0
        %v579 = vmax.f32 %v526, 0.0
        %v580 = vmax.f32 %v530, 0.0
        %v581 = vmax.f32 %v532, 0.0
        %v582 = vmax.f32 %v536, 0.0
        %v583 = vmax.f32 %v538, 0.0
        %v584 = vmax.f32 %v542, 0.0
        %v585 = vmax.f32 %v544, 0.0
        %v586 = vmax.f32 %v548, 0.0
        %v587 = vmax.f32 %v550, 0.0
        %v588 = vmax.f32 %v554, 0.0
        %v589 = vmax.f32 %v556, 0.0
        %v590 = vld [vmem:[#allocation6] sm:$0xff]
        %v591 = vld [vmem:[#allocation6 + $0x8] sm:$0xff]
        %v592 = vld [vmem:[#allocation6 + $0x10] sm:$0xff]
        %v593 = vld [vmem:[#allocation6 + $0x18] sm:$0xff]
        %v594 = vld [vmem:[#allocation6 + $0x20] sm:$0xff]
        %v595 = vld [vmem:[#allocation6 + $0x28] sm:$0xff]
        %v596 = vld [vmem:[#allocation6 + $0x30] sm:$0xff]
        %v597 = vld [vmem:[#allocation6 + $0x38] sm:$0xff]
        %v598 = vld [vmem:[#allocation6 + $0x40] sm:$0xff]
        %v599 = vld [vmem:[#allocation6 + $0x48] sm:$0xff]
        %v600 = vld [vmem:[#allocation6 + $0x50] sm:$0xff]
        %v601 = vld [vmem:[#allocation6 + $0x58] sm:$0xff]
        %v602 = vld [vmem:[#allocation6 + $0x60] sm:$0xff]
        %v603 = vld [vmem:[#allocation6 + $0x68] sm:$0xff]
        %v604 = vld [vmem:[#allocation6 + $0x70] sm:$0xff]
        %v605 = vld [vmem:[#allocation6 + $0x78] sm:$0xff]
        %v606 = vld [vmem:[#allocation6 + $0x80] sm:$0xff]
        %v607 = vld [vmem:[#allocation6 + $0x88] sm:$0xff]
        %v608 = vld [vmem:[#allocation6 + $0x90] sm:$0xff]
        %v609 = vld [vmem:[#allocation6 + $0x98] sm:$0xff]
        %v610 = vld [vmem:[#allocation6 + $0xa0] sm:$0xff]
        %v611 = vld [vmem:[#allocation6 + $0xa8] sm:$0xff]
        %v612 = vld [vmem:[#allocation6 + $0xb0] sm:$0xff]
        %v613 = vld [vmem:[#allocation6 + $0xb8] sm:$0xff]
        %v614 = vld [vmem:[#allocation6 + $0xc0] sm:$0xff]
        %v615 = vld [vmem:[#allocation6 + $0xc8] sm:$0xff]
        %v616 = vld [vmem:[#allocation6 + $0xd0] sm:$0xff]
        %v617 = vld [vmem:[#allocation6 + $0xd8] sm:$0xff]
        %v618 = vld [vmem:[#allocation6 + $0xe0] sm:$0xff]
        %v619 = vld [vmem:[#allocation6 + $0xe8] sm:$0xff]
        %v620 = vld [vmem:[#allocation6 + $0xf0] sm:$0xff]
        %v621 = vld [vmem:[#allocation6 + $0xf8] sm:$0xff]
        %622 = vmatprep.subr.mxu0 0.0
        %623 = vmatpush1.msra.mxu0 %v590
        %624 = vmatprep.subr.mxu0 0.0
        %625 = vmatpush1.msra.mxu0 %v591
        %626 = vmatprep.subr.mxu0 0.0
        %627 = vmatpush1.msra.mxu0 %v592
        %628 = vmatprep.subr.mxu0 0.0
        %629 = vmatpush1.msra.mxu0 %v593
        %630 = vmatprep.subr.mxu0 0.0
        %631 = vmatpush1.msra.mxu0 %v594
        %632 = vmatprep.subr.mxu0 0.0
        %633 = vmatpush1.msra.mxu0 %v595
        %634 = vmatprep.subr.mxu0 0.0
        %635 = vmatpush1.msra.mxu0 %v596
        %636 = vmatprep.subr.mxu0 0.0
        %637 = vmatpush1.msra.mxu0 %v597
        %638 = vmatprep.subr.mxu0 0.0
        %639 = vmatpush1.msra.mxu0 %v598
        %640 = vmatprep.subr.mxu0 0.0
        %641 = vmatpush1.msra.mxu0 %v599
        %642 = vmatprep.subr.mxu0 0.0
        %643 = vmatpush1.msra.mxu0 %v600
        %644 = vmatprep.subr.mxu0 0.0
        %645 = vmatpush1.msra.mxu0 %v601
        %646 = vmatprep.subr.mxu0 0.0
        %647 = vmatpush1.msra.mxu0 %v602
        %648 = vmatprep.subr.mxu0 0.0
        %649 = vmatpush1.msra.mxu0 %v603
        %650 = vmatprep.subr.mxu0 0.0
        %651 = vmatpush1.msra.mxu0 %v604
        %652 = vmatprep.subr.mxu0 0.0
        %653 = vmatpush1.msra.mxu0 %v605
        %654 = vmatprep.subr.mxu0 0.0
        %655 = vmatpush1.msra.mxu0 %v606
        %656 = vmatprep.subr.mxu0 0.0
        %657 = vmatpush1.msra.mxu0 %v607
        %658 = vmatprep.subr.mxu0 0.0
        %659 = vmatpush1.msra.mxu0 %v608
        %660 = vmatprep.subr.mxu0 0.0
        %661 = vmatpush1.msra.mxu0 %v609
        %662 = vmatprep.subr.mxu0 0.0
        %663 = vmatpush1.msra.mxu0 %v610
        %664 = vmatprep.subr.mxu0 0.0
        %665 = vmatpush1.msra.mxu0 %v611
        %666 = vmatprep.subr.mxu0 0.0
        %667 = vmatpush1.msra.mxu0 %v612
        %668 = vmatprep.subr.mxu0 0.0
        %669 = vmatpush1.msra.mxu0 %v613
        %670 = vmatprep.subr.mxu0 0.0
        %671 = vmatpush1.msra.mxu0 %v614
        %672 = vmatprep.subr.mxu0 0.0
        %673 = vmatpush1.msra.mxu0 %v615
        %674 = vmatprep.subr.mxu0 0.0
        %675 = vmatpush1.msra.mxu0 %v616
        %676 = vmatprep.subr.mxu0 0.0
        %677 = vmatpush1.msra.mxu0 %v617
        %678 = vmatprep.subr.mxu0 0.0
        %679 = vmatpush1.msra.mxu0 %v618
        %680 = vmatprep.subr.mxu0 0.0
        %681 = vmatpush1.msra.mxu0 %v619
        %682 = vmatprep.subr.mxu0 0.0
        %683 = vmatpush1.msra.mxu0 %v620
        %684 = vmatprep.subr.mxu0 0.0
        %685 = vmatpush1.msra.mxu0 %v621
        %686 = vmatprep.mubr.f32.mxu0 %v559
        %687 = vmatmul.mubr.f32.gmra.mrb[0].mxu0 %v558
        %v688 = vpop.f32.mrb[0].mxu0
        %v689 = vadd.f32 %v320, %v688
        %v690 = vpop.f32.mrb[0].mxu0
        %691 = vmatprep.mubr.f32.mxu0 %v561
        %692 = vmatmul.mubr.f32.gmra.mrb[0].mxu0 %v560
        %v693 = vpop.f32.mrb[0].mxu0
        %v694 = vadd.f32 %v320, %v693
        %v695 = vpop.f32.mrb[0].mxu0
        %696 = vmatprep.mubr.f32.mxu0 %v563
        %697 = vmatmul.mubr.f32.gmra.mrb[0].mxu0 %v562
        %v698 = vpop.f32.mrb[0].mxu0
        %v699 = vadd.f32 %v320, %v698
        %v700 = vpop.f32.mrb[0].mxu0
        %701 = vmatprep.mubr.f32.mxu0 %v565
        %702 = vmatmul.mubr.f32.gmra.mrb[0].mxu0 %v564
        %v703 = vpop.f32.mrb[0].mxu0
        %v704 = vadd.f32 %v320, %v703
        %v705 = vpop.f32.mrb[0].mxu0
        %706 = vmatprep.mubr.f32.mxu0 %v567
        %707 = vmatmul.mubr.f32.gmra.mrb[0].mxu0 %v566
        %v708 = vpop.f32.mrb[0].mxu0
        %v709 = vadd.f32 %v320, %v708
        %v710 = vpop.f32.mrb[0].mxu0
        %711 = vmatprep.mubr.f32.mxu0 %v569
        %712 = vmatmul.mubr.f32.gmra.mrb[0].mxu0 %v568
        %v713 = vpop.f32.mrb[0].mxu0
        %v714 = vadd.f32 %v320, %v713
        %v715 = vpop.f32.mrb[0].mxu0
        %716 = vmatprep.mubr.f32.mxu0 %v571
        %717 = vmatmul.mubr.f32.gmra.mrb[0].mxu0 %v570
        %v718 = vpop.f32.mrb[0].mxu0
        %v719 = vadd.f32 %v320, %v718
        %v720 = vpop.f32.mrb[0].mxu0
        %721 = vmatprep.mubr.f32.mxu0 %v573
        %722 = vmatmul.mubr.f32.gmra.mrb[0].mxu0 %v572
        %v723 = vpop.f32.mrb[0].mxu0
        %v724 = vadd.f32 %v320, %v723
        %v725 = vpop.f32.mrb[0].mxu0
        %726 = vmatprep.mubr.f32.mxu0 %v575
        %727 = vmatmul.mubr.f32.gmra.mrb[0].mxu0 %v574
        %v728 = vpop.f32.mrb[0].mxu0
        %v729 = vadd.f32 %v320, %v728
        %v730 = vpop.f32.mrb[0].mxu0
        %731 = vmatprep.mubr.f32.mxu0 %v577
        %732 = vmatmul.mubr.f32.gmra.mrb[0].mxu0 %v576
        %v733 = vpop.f32.mrb[0].mxu0
        %v734 = vadd.f32 %v320, %v733
        %v735 = vpop.f32.mrb[0].mxu0
        %736 = vmatprep.mubr.f32.mxu0 %v579
        %737 = vmatmul.mubr.f32.gmra.mrb[0].mxu0 %v578
        %v738 = vpop.f32.mrb[0].mxu0
        %v739 = vadd.f32 %v320, %v738
        %v740 = vpop.f32.mrb[0].mxu0
        %741 = vmatprep.mubr.f32.mxu0 %v581
        %742 = vmatmul.mubr.f32.gmra.mrb[0].mxu0 %v580
        %v743 = vpop.f32.mrb[0].mxu0
        %v744 = vadd.f32 %v320, %v743
        %v745 = vpop.f32.mrb[0].mxu0
        %746 = vmatprep.mubr.f32.mxu0 %v583
        %747 = vmatmul.mubr.f32.gmra.mrb[0].mxu0 %v582
        %v748 = vpop.f32.mrb[0].mxu0
        %v749 = vadd.f32 %v320, %v748
        %v750 = vpop.f32.mrb[0].mxu0
        %751 = vmatprep.mubr.f32.mxu0 %v585
        %752 = vmatmul.mubr.f32.gmra.mrb[0].mxu0 %v584
        %v753 = vpop.f32.mrb[0].mxu0
        %v754 = vadd.f32 %v320, %v753
        %v755 = vpop.f32.mrb[0].mxu0
        %756 = vmatprep.mubr.f32.mxu0 %v587
        %757 = vmatmul.mubr.f32.gmra.mrb[0].mxu0 %v586
        %v758 = vpop.f32.mrb[0].mxu0
        %v759 = vadd.f32 %v320, %v758
        %v760 = vpop.f32.mrb[0].mxu0
        %761 = vmatprep.mubr.f32.mxu0 %v589
        %762 = vmatmul.mubr.f32.gmra.mrb[0].mxu0 %v588
        %v763 = vpop.f32.mrb[0].mxu0
        %v764 = vadd.f32 %v320, %v763
        %v765 = vpop.f32.mrb[0].mxu0
        %766 = vdwg.mxu0
        %v767 = vmax.f32 %v689, 0.0
        %v768 = vmax.f32 %v694, 0.0
        %v769 = vmax.f32 %v699, 0.0
        %v770 = vmax.f32 %v704, 0.0
        %v771 = vmax.f32 %v709, 0.0
        %v772 = vmax.f32 %v714, 0.0
        %v773 = vmax.f32 %v719, 0.0
        %v774 = vmax.f32 %v724, 0.0
        %v775 = vmax.f32 %v729, 0.0
        %v776 = vmax.f32 %v734, 0.0
        %v777 = vmax.f32 %v739, 0.0
        %v778 = vmax.f32 %v744, 0.0
        %v779 = vmax.f32 %v749, 0.0
        %v780 = vmax.f32 %v754, 0.0
        %v781 = vmax.f32 %v759, 0.0
        %v782 = vmax.f32 %v764, 0.0
        %v783 = vld [vmem:[%s3] sm:$0xff]
        %v784 = vld [vmem:[%s3 + $0x8] sm:$0xff]
        %v785 = vld [vmem:[%s3 + $0x10] sm:$0xff]
        %v786 = vld [vmem:[%s3 + $0x18] sm:$0xff]
        %v787 = vld [vmem:[%s3 + $0x20] sm:$0xff]
        %v788 = vld [vmem:[%s3 + $0x28] sm:$0xff]
        %v789 = vld [vmem:[%s3 + $0x30] sm:$0xff]
        %v790 = vld [vmem:[%s3 + $0x38] sm:$0xff]
        %v791 = vld [vmem:[%s3 + $0x40] sm:$0xff]
        %v792 = vld [vmem:[%s3 + $0x48] sm:$0xff]
        %v793 = vld [vmem:[%s3 + $0x50] sm:$0xff]
        %v794 = vld [vmem:[%s3 + $0x58] sm:$0xff]
        %v795 = vld [vmem:[%s3 + $0x60] sm:$0xff]
        %v796 = vld [vmem:[%s3 + $0x68] sm:$0xff]
        %v797 = vld [vmem:[%s3 + $0x70] sm:$0xff]
        %v798 = vld [vmem:[%s3 + $0x78] sm:$0xff]
        %799 = vmatprep.subr.mxu0 0.0
        %800 = vmatpush1.msra.mxu0 %v783
        %801 = vmatprep.subr.mxu0 0.0
        %802 = vmatpush1.msra.mxu0 %v784
        %803 = vmatprep.subr.mxu0 0.0
        %804 = vmatpush1.msra.mxu0 %v785
        %805 = vmatprep.subr.mxu0 0.0
        %806 = vmatpush1.msra.mxu0 %v786
        %807 = vmatprep.subr.mxu0 0.0
        %808 = vmatpush1.msra.mxu0 %v787
        %809 = vmatprep.subr.mxu0 0.0
        %810 = vmatpush1.msra.mxu0 %v788
        %811 = vmatprep.subr.mxu0 0.0
        %812 = vmatpush1.msra.mxu0 %v789
        %813 = vmatprep.subr.mxu0 0.0
        %814 = vmatpush1.msra.mxu0 %v790
        %815 = vmatprep.subr.mxu0 0.0
        %816 = vmatpush1.msra.mxu0 %v791
        %817 = vmatprep.subr.mxu0 0.0
        %818 = vmatpush1.msra.mxu0 %v792
        %819 = vmatprep.subr.mxu0 0.0
        %820 = vmatpush1.msra.mxu0 %v793
        %821 = vmatprep.subr.mxu0 0.0
        %822 = vmatpush1.msra.mxu0 %v794
        %823 = vmatprep.subr.mxu0 0.0
        %824 = vmatpush1.msra.mxu0 %v795
        %825 = vmatprep.subr.mxu0 0.0
        %826 = vmatpush1.msra.mxu0 %v796
        %827 = vmatprep.subr.mxu0 0.0
        %828 = vmatpush1.msra.mxu0 %v797
        %829 = vmatprep.subr.mxu0 0.0
        %830 = vmatpush1.msra.mxu0 %v798
        %831 = vmatprep.subr.mxu0 0.0
        %832 = vmatpush1.msra.mxu0 0.0
        %833 = vmatprep.subr.mxu0 0.0
        %834 = vmatpush1.msra.mxu0 0.0
        %835 = vmatprep.subr.mxu0 0.0
        %836 = vmatpush1.msra.mxu0 0.0
        %837 = vmatprep.subr.mxu0 0.0
        %838 = vmatpush1.msra.mxu0 0.0
        %839 = vmatprep.subr.mxu0 0.0
        %840 = vmatpush1.msra.mxu0 0.0
        %841 = vmatprep.subr.mxu0 0.0
        %842 = vmatpush1.msra.mxu0 0.0
        %843 = vmatprep.subr.mxu0 0.0
        %844 = vmatpush1.msra.mxu0 0.0
        %845 = vmatprep.subr.mxu0 0.0
        %846 = vmatpush1.msra.mxu0 0.0
        %847 = vmatprep.subr.mxu0 0.0
        %848 = vmatpush1.msra.mxu0 0.0
        %849 = vmatprep.subr.mxu0 0.0
        %850 = vmatpush1.msra.mxu0 0.0
        %851 = vmatprep.subr.mxu0 0.0
        %852 = vmatpush1.msra.mxu0 0.0
        %853 = vmatprep.subr.mxu0 0.0
        %854 = vmatpush1.msra.mxu0 0.0
        %855 = vmatprep.subr.mxu0 0.0
        %856 = vmatpush1.msra.mxu0 0.0
        %857 = vmatprep.subr.mxu0 0.0
        %858 = vmatpush1.msra.mxu0 0.0
        %859 = vmatprep.subr.mxu0 0.0
        %860 = vmatpush1.msra.mxu0 0.0
        %861 = vmatprep.subr.mxu0 0.0
        %862 = vmatpush1.msra.mxu0 0.0
        %863 = vmatprep.mubr.f32.mxu0 0.0
        %864 = vmatmul.mubr.f32.gmra.mrb[0].mxu0 %v767
        %v865 = vpop.f32.mrb[0].mxu0
        %v866 = vadd.f32 %v321, %v865
        %v867 = vpop.f32.mrb[0].mxu0
        %868 = vmatprep.mubr.f32.mxu0 0.0
        %869 = vmatmul.mubr.f32.gmra.mrb[0].mxu0 %v768
        %v870 = vpop.f32.mrb[0].mxu0
        %v871 = vadd.f32 %v321, %v870
        %v872 = vpop.f32.mrb[0].mxu0
        %873 = vmatprep.mubr.f32.mxu0 0.0
        %874 = vmatmul.mubr.f32.gmra.mrb[0].mxu0 %v769
        %v875 = vpop.f32.mrb[0].mxu0
        %v876 = vadd.f32 %v321, %v875
        %v877 = vpop.f32.mrb[0].mxu0
        %878 = vmatprep.mubr.f32.mxu0 0.0
        %879 = vmatmul.mubr.f32.gmra.mrb[0].mxu0 %v770
        %v880 = vpop.f32.mrb[0].mxu0
        %v881 = vadd.f32 %v321, %v880
        %v882 = vpop.f32.mrb[0].mxu0
        %883 = vmatprep.mubr.f32.mxu0 0.0
        %884 = vmatmul.mubr.f32.gmra.mrb[0].mxu0 %v771
        %v885 = vpop.f32.mrb[0].mxu0
        %v886 = vadd.f32 %v321, %v885
        %v887 = vpop.f32.mrb[0].mxu0
        %888 = vmatprep.mubr.f32.mxu0 0.0
        %889 = vmatmul.mubr.f32.gmra.mrb[0].mxu0 %v772
        %v890 = vpop.f32.mrb[0].mxu0
        %v891 = vadd.f32 %v321, %v890
        %v892 = vpop.f32.mrb[0].mxu0
        %893 = vmatprep.mubr.f32.mxu0 0.0
        %894 = vmatmul.mubr.f32.gmra.mrb[0].mxu0 %v773
        %v895 = vpop.f32.mrb[0].mxu0
        %v896 = vadd.f32 %v321, %v895
        %v897 = vpop.f32.mrb[0].mxu0
        %898 = vmatprep.mubr.f32.mxu0 0.0
        %899 = vmatmul.mubr.f32.gmra.mrb[0].mxu0 %v774
        %v900 = vpop.f32.mrb[0].mxu0
        %v901 = vadd.f32 %v321, %v900
        %v902 = vpop.f32.mrb[0].mxu0
        %903 = vmatprep.mubr.f32.mxu0 0.0
        %904 = vmatmul.mubr.f32.gmra.mrb[0].mxu0 %v775
        %v905 = vpop.f32.mrb[0].mxu0
        %v906 = vadd.f32 %v321, %v905
        %v907 = vpop.f32.mrb[0].mxu0
        %908 = vmatprep.mubr.f32.mxu0 0.0
        %909 = vmatmul.mubr.f32.gmra.mrb[0].mxu0 %v776
        %v910 = vpop.f32.mrb[0].mxu0
        %v911 = vadd.f32 %v321, %v910
        %v912 = vpop.f32.mrb[0].mxu0
        %913 = vmatprep.mubr.f32.mxu0 0.0
        %914 = vmatmul.mubr.f32.gmra.mrb[0].mxu0 %v777
        %v915 = vpop.f32.mrb[0].mxu0
        %v916 = vadd.f32 %v321, %v915
        %v917 = vpop.f32.mrb[0].mxu0
        %918 = vmatprep.mubr.f32.mxu0 0.0
        %919 = vmatmul.mubr.f32.gmra.mrb[0].mxu0 %v778
        %v920 = vpop.f32.mrb[0].mxu0
        %v921 = vadd.f32 %v321, %v920
        %v922 = vpop.f32.mrb[0].mxu0
        %923 = vmatprep.mubr.f32.mxu0 0.0
        %924 = vmatmul.mubr.f32.gmra.mrb[0].mxu0 %v779
        %v925 = vpop.f32.mrb[0].mxu0
        %v926 = vadd.f32 %v321, %v925
        %v927 = vpop.f32.mrb[0].mxu0
        %928 = vmatprep.mubr.f32.mxu0 0.0
        %929 = vmatmul.mubr.f32.gmra.mrb[0].mxu0 %v780
        %v930 = vpop.f32.mrb[0].mxu0
        %v931 = vadd.f32 %v321, %v930
        %v932 = vpop.f32.mrb[0].mxu0
        %933 = vmatprep.mubr.f32.mxu0 0.0
        %934 = vmatmul.mubr.f32.gmra.mrb[0].mxu0 %v781
        %v935 = vpop.f32.mrb[0].mxu0
        %v936 = vadd.f32 %v321, %v935
        %v937 = vpop.f32.mrb[0].mxu0
        %938 = vmatprep.mubr.f32.mxu0 0.0
        %939 = vmatmul.mubr.f32.gmra.mrb[0].mxu0 %v782
        %v940 = vpop.f32.mrb[0].mxu0
        %v941 = vadd.f32 %v321, %v940
        %v942 = vpop.f32.mrb[0].mxu0
        %943 = vdwg.mxu0
        %vm944 = vcmask 64512
        %945 = vst.msk [vmem:[%s275] sm:$0xff] %vm944, %v866
        %946 = vst.msk [vmem:[%s275 + $0x8] sm:$0xff] %vm944, %v871
        %947 = vst.msk [vmem:[%s275 + $0x10] sm:$0xff] %vm944, %v876
        %948 = vst.msk [vmem:[%s275 + $0x18] sm:$0xff] %vm944, %v881
        %949 = vst.msk [vmem:[%s275 + $0x20] sm:$0xff] %vm944, %v886
        %950 = vst.msk [vmem:[%s275 + $0x28] sm:$0xff] %vm944, %v891
        %951 = vst.msk [vmem:[%s275 + $0x30] sm:$0xff] %vm944, %v896
        %952 = vst.msk [vmem:[%s275 + $0x38] sm:$0xff] %vm944, %v901
        %953 = vst.msk [vmem:[%s275 + $0x40] sm:$0xff] %vm944, %v906
        %954 = vst.msk [vmem:[%s275 + $0x48] sm:$0xff] %vm944, %v911
        %955 = vst.msk [vmem:[%s275 + $0x50] sm:$0xff] %vm944, %v916
        %956 = vst.msk [vmem:[%s275 + $0x58] sm:$0xff] %vm944, %v921
        %957 = vst.msk [vmem:[%s275 + $0x60] sm:$0xff] %vm944, %v926
        %958 = vst.msk [vmem:[%s275 + $0x68] sm:$0xff] %vm944, %v931
        %959 = vst.msk [vmem:[%s275 + $0x70] sm:$0xff] %vm944, %v936
        %960 = vst.msk [vmem:[%s275 + $0x78] sm:$0xff] %vm944, %v941
        %s961 = sand.u32 %s138, 1
        %s962 = sand.u32 %s138, 1
        %s963 = smul.addr %s962, 128
        %s964 = scalar_lea.vmem [#allocation7], %s963
        // Predicated region
        $region53: #{decision_forward.1} parent=39 // pred_check
          %p965 = pneg %p148
        $region54: #{decision_forward.1} parent=39 // pred_check_branch
          %967 = sbr.rel (%p965) target = $region56
        $region55: #{decision_forward.1} parent=39 // pred_region
          %s968 = smul.u32 16, %s20
          %s969 = ssub.s32 25, %s968
          %p970 = scmp.lt.s32.totalorder %s969, 16
          %s971 = scalar_select %p970, %s969, 16
          %s972 = smul.u32 128, %s971
          %p973 = scmp.ne.s32.totalorder 0, %s972
          %s974 = smul.addr %s968, 8
          %s975 = scalar_lea.vmem %s5, %s974
          // Predicated region
          $region57: #{decision_forward.1} parent=55 // pred_check
            %p976 = pneg %p973
          $region58: #{decision_forward.1} parent=55 // pred_check_branch
            %978 = sbr.rel (%p976) target = $region60
          $region59: #{decision_forward.1} parent=55 // pred_region
            // Predicated region
            $region61: #{decision_forward.1} parent=59 // pred_check
              _
            $region62: #{decision_forward.1} parent=59 // pred_check_branch
              %980 = sbr.rel (0) target = $region64
            $region63: #{decision_forward.1} parent=59 // pred_region
              // Predicated region
              $region83: #{decision_forward.1} parent=63 // pred_check
                _
              $region84: #{decision_forward.1} parent=63 // pred_check_branch
                %1059 = sbr.rel (0) target = $region86
              $region85: #{decision_forward.1} parent=63 // pred_region
                %s1060 = sshrl.u32 %s971, 4
                // While loop
                $region87: #{decision_forward.1} parent=85 // loop_pre_header
                  _
                $region88: #{decision_forward.1} parent=85 // loop_header
                  %s1062 = sphi 0, %s1064
                  %p1063 = scmp.ge.s32.totalorder %s1062, %s1060
                  %s1067 = sphi 0, %s1104
                  %s1068 = sphi %s964, %s1107
                  %s1069 = sphi %s975, %s1108
                $region89: #{decision_forward.1} parent=85 // loop_header_branch
                  %1066 = sbr.rel (%p1063) target = $region93
                $region90: #{decision_forward.1} parent=85 // loop_body
                  %v1070 = vld [vmem:[%s1068] sm:$0xff]
                  %1071 = vst [vmem:[%s1069] sm:$0xff] %v1070
                  %v1072 = vld [vmem:[%s1068 + $0x8] sm:$0xff]
                  %1073 = vst [vmem:[%s1069 + $0x8] sm:$0xff] %v1072
                  %v1074 = vld [vmem:[%s1068 + $0x10] sm:$0xff]
                  %1075 = vst [vmem:[%s1069 + $0x10] sm:$0xff] %v1074
                  %v1076 = vld [vmem:[%s1068 + $0x18] sm:$0xff]
                  %1077 = vst [vmem:[%s1069 + $0x18] sm:$0xff] %v1076
                  %v1078 = vld [vmem:[%s1068 + $0x20] sm:$0xff]
                  %1079 = vst [vmem:[%s1069 + $0x20] sm:$0xff] %v1078
                  %v1080 = vld [vmem:[%s1068 + $0x28] sm:$0xff]
                  %1081 = vst [vmem:[%s1069 + $0x28] sm:$0xff] %v1080
                  %v1082 = vld [vmem:[%s1068 + $0x30] sm:$0xff]
                  %1083 = vst [vmem:[%s1069 + $0x30] sm:$0xff] %v1082
                  %v1084 = vld [vmem:[%s1068 + $0x38] sm:$0xff]
                  %1085 = vst [vmem:[%s1069 + $0x38] sm:$0xff] %v1084
                  %v1086 = vld [vmem:[%s1068 + $0x40] sm:$0xff]
                  %1087 = vst [vmem:[%s1069 + $0x40] sm:$0xff] %v1086
                  %v1088 = vld [vmem:[%s1068 + $0x48] sm:$0xff]
                  %1089 = vst [vmem:[%s1069 + $0x48] sm:$0xff] %v1088
                  %v1090 = vld [vmem:[%s1068 + $0x50] sm:$0xff]
                  %1091 = vst [vmem:[%s1069 + $0x50] sm:$0xff] %v1090
                  %v1092 = vld [vmem:[%s1068 + $0x58] sm:$0xff]
                  %1093 = vst [vmem:[%s1069 + $0x58] sm:$0xff] %v1092
                  %v1094 = vld [vmem:[%s1068 + $0x60] sm:$0xff]
                  %1095 = vst [vmem:[%s1069 + $0x60] sm:$0xff] %v1094
                  %v1096 = vld [vmem:[%s1068 + $0x68] sm:$0xff]
                  %1097 = vst [vmem:[%s1069 + $0x68] sm:$0xff] %v1096
                  %v1098 = vld [vmem:[%s1068 + $0x70] sm:$0xff]
                  %1099 = vst [vmem:[%s1069 + $0x70] sm:$0xff] %v1098
                  %v1100 = vld [vmem:[%s1068 + $0x78] sm:$0xff]
                  %1101 = vst [vmem:[%s1069 + $0x78] sm:$0xff] %v1100
                  %s1102 = sadd.s32 1, %s1067
                  %p1103 = scmp.ge.s32.totalorder %s1102, %s1060
                  %s1104 = scalar_select %p1103, 0, %s1102
                  %s1105 = smul.u32 %s1104, 128
                  %s1106 = smul.u32 %s1104, 128
                  %s1107 = scalar_lea.vmem %s964, %s1105 [#allocation7]
                  %s1108 = scalar_lea.vmem %s975, %s1106
                $region91: #{decision_forward.1} parent=85 // loop_footer
                  %s1064 = sadd.s32 %s1062, 1
                $region92: #{decision_forward.1} parent=85 // loop_footer_branch
                  %1061 = sbr.rel target = $region88
                $region93: #{decision_forward.1} parent=85 // loop_exit
                  _
                %s1109 = sshrl.u32 %s971, 4
                %s1110 = sand.u32 %s971, 15
                %s1111 = smul.u32 %s1109, 16
                %s1112 = smul.u32 8, %s1111
                %s1113 = scalar_lea.vmem %s964, %s1112 [#allocation7]
                %s1114 = smul.u32 8, %s1111
                %s1115 = scalar_lea.vmem %s975, %s1114
                // While loop
                $region94: #{decision_forward.1} parent=85 // loop_pre_header
                  _
                $region95: #{decision_forward.1} parent=85 // loop_header
                  %s1117 = sphi 0, %s1119
                  %p1118 = scmp.ge.s32.totalorder %s1117, %s1110
                  %s1122 = sphi 0, %s1129
                  %s1123 = sphi %s1113, %s1132
                  %s1124 = sphi %s1115, %s1133
                $region96: #{decision_forward.1} parent=85 // loop_header_branch
                  %1121 = sbr.rel (%p1118) target = $region100
                $region97: #{decision_forward.1} parent=85 // loop_body
                  %v1125 = vld [vmem:[%s1123] sm:$0xff]
                  %1126 = vst [vmem:[%s1124] sm:$0xff] %v1125
                  %s1127 = sadd.s32 1, %s1122
                  %p1128 = scmp.ge.s32.totalorder %s1127, %s1110
                  %s1129 = scalar_select %p1128, 0, %s1127
                  %s1130 = smul.u32 %s1129, 8
                  %s1131 = smul.u32 %s1129, 8
                  %s1132 = scalar_lea.vmem %s1113, %s1130 [#allocation7]
                  %s1133 = scalar_lea.vmem %s1115, %s1131
                $region98: #{decision_forward.1} parent=85 // loop_footer
                  %s1119 = sadd.s32 %s1117, 1
                $region99: #{decision_forward.1} parent=85 // loop_footer_branch
                  %1116 = sbr.rel target = $region95
                $region100: #{decision_forward.1} parent=85 // loop_exit
                  _
              $region86: #{decision_forward.1} parent=63 // pred_fallthru
                _
              // Predicated region
              $region101: #{decision_forward.1} parent=63 // pred_check
                _
              $region102: #{decision_forward.1} parent=63 // pred_check_branch
                %1135 = sbr.rel target = $region104
              $region103: #{decision_forward.1} parent=63 // pred_region
                _
              $region104: #{decision_forward.1} parent=63 // pred_fallthru
                _
            $region64: #{decision_forward.1} parent=59 // pred_fallthru
              _
            // Predicated region
            $region65: #{decision_forward.1} parent=59 // pred_check
              _
            $region66: #{decision_forward.1} parent=59 // pred_check_branch
              %982 = sbr.rel target = $region68
            $region67: #{decision_forward.1} parent=59 // pred_region
              %s984 = sshrl.u32 %s971, 4
              // While loop
              $region69: #{decision_forward.1} parent=67 // loop_pre_header
                _
              $region70: #{decision_forward.1} parent=67 // loop_header
                %s986 = sphi 0, %s988
                %p987 = scmp.ge.s32.totalorder %s986, %s984
                %s991 = sphi 0, %s1028
                %s992 = sphi %s964, %s1031
                %s993 = sphi %s975, %s1032
              $region71: #{decision_forward.1} parent=67 // loop_header_branch
                %990 = sbr.rel (%p987) target = $region75
              $region72: #{decision_forward.1} parent=67 // loop_body
                %v994 = vld [vmem:[%s992] sm:$0xff]
                %995 = vst [vmem:[%s993] sm:$0xff] %v994
                %v996 = vld [vmem:[%s992 + $0x8] sm:$0xff]
                %997 = vst [vmem:[%s993 + $0x8] sm:$0xff] %v996
                %v998 = vld [vmem:[%s992 + $0x10] sm:$0xff]
                %999 = vst [vmem:[%s993 + $0x10] sm:$0xff] %v998
                %v1000 = vld [vmem:[%s992 + $0x18] sm:$0xff]
                %1001 = vst [vmem:[%s993 + $0x18] sm:$0xff] %v1000
                %v1002 = vld [vmem:[%s992 + $0x20] sm:$0xff]
                %1003 = vst [vmem:[%s993 + $0x20] sm:$0xff] %v1002
                %v1004 = vld [vmem:[%s992 + $0x28] sm:$0xff]
                %1005 = vst [vmem:[%s993 + $0x28] sm:$0xff] %v1004
                %v1006 = vld [vmem:[%s992 + $0x30] sm:$0xff]
                %1007 = vst [vmem:[%s993 + $0x30] sm:$0xff] %v1006
                %v1008 = vld [vmem:[%s992 + $0x38] sm:$0xff]
                %1009 = vst [vmem:[%s993 + $0x38] sm:$0xff] %v1008
                %v1010 = vld [vmem:[%s992 + $0x40] sm:$0xff]
                %1011 = vst [vmem:[%s993 + $0x40] sm:$0xff] %v1010
                %v1012 = vld [vmem:[%s992 + $0x48] sm:$0xff]
                %1013 = vst [vmem:[%s993 + $0x48] sm:$0xff] %v1012
                %v1014 = vld [vmem:[%s992 + $0x50] sm:$0xff]
                %1015 = vst [vmem:[%s993 + $0x50] sm:$0xff] %v1014
                %v1016 = vld [vmem:[%s992 + $0x58] sm:$0xff]
                %1017 = vst [vmem:[%s993 + $0x58] sm:$0xff] %v1016
                %v1018 = vld [vmem:[%s992 + $0x60] sm:$0xff]
                %1019 = vst [vmem:[%s993 + $0x60] sm:$0xff] %v1018
                %v1020 = vld [vmem:[%s992 + $0x68] sm:$0xff]
                %1021 = vst [vmem:[%s993 + $0x68] sm:$0xff] %v1020
                %v1022 = vld [vmem:[%s992 + $0x70] sm:$0xff]
                %1023 = vst [vmem:[%s993 + $0x70] sm:$0xff] %v1022
                %v1024 = vld [vmem:[%s992 + $0x78] sm:$0xff]
                %1025 = vst [vmem:[%s993 + $0x78] sm:$0xff] %v1024
                %s1026 = sadd.s32 1, %s991
                %p1027 = scmp.ge.s32.totalorder %s1026, %s984
                %s1028 = scalar_select %p1027, 0, %s1026
                %s1029 = smul.u32 %s1028, 128
                %s1030 = smul.u32 %s1028, 128
                %s1031 = scalar_lea.vmem %s964, %s1029 [#allocation7]
                %s1032 = scalar_lea.vmem %s975, %s1030
              $region73: #{decision_forward.1} parent=67 // loop_footer
                %s988 = sadd.s32 %s986, 1
              $region74: #{decision_forward.1} parent=67 // loop_footer_branch
                %985 = sbr.rel target = $region70
              $region75: #{decision_forward.1} parent=67 // loop_exit
                _
              %s1033 = sshrl.u32 %s971, 4
              %s1034 = sand.u32 %s971, 15
              %s1035 = smul.u32 %s1033, 16
              %s1036 = smul.u32 8, %s1035
              %s1037 = scalar_lea.vmem %s964, %s1036 [#allocation7]
              %s1038 = smul.u32 8, %s1035
              %s1039 = scalar_lea.vmem %s975, %s1038
              // While loop
              $region76: #{decision_forward.1} parent=67 // loop_pre_header
                _
              $region77: #{decision_forward.1} parent=67 // loop_header
                %s1041 = sphi 0, %s1043
                %p1042 = scmp.ge.s32.totalorder %s1041, %s1034
                %s1046 = sphi 0, %s1053
                %s1047 = sphi %s1037, %s1056
                %s1048 = sphi %s1039, %s1057
              $region78: #{decision_forward.1} parent=67 // loop_header_branch
                %1045 = sbr.rel (%p1042) target = $region82
              $region79: #{decision_forward.1} parent=67 // loop_body
                %v1049 = vld [vmem:[%s1047] sm:$0xff]
                %1050 = vst [vmem:[%s1048] sm:$0xff] %v1049
                %s1051 = sadd.s32 1, %s1046
                %p1052 = scmp.ge.s32.totalorder %s1051, %s1034
                %s1053 = scalar_select %p1052, 0, %s1051
                %s1054 = smul.u32 %s1053, 8
                %s1055 = smul.u32 %s1053, 8
                %s1056 = scalar_lea.vmem %s1037, %s1054 [#allocation7]
                %s1057 = scalar_lea.vmem %s1039, %s1055
              $region80: #{decision_forward.1} parent=67 // loop_footer
                %s1043 = sadd.s32 %s1041, 1
              $region81: #{decision_forward.1} parent=67 // loop_footer_branch
                %1040 = sbr.rel target = $region77
              $region82: #{decision_forward.1} parent=67 // loop_exit
                _
            $region68: #{decision_forward.1} parent=59 // pred_fallthru
              _
          $region60: #{decision_forward.1} parent=55 // pred_fallthru
            _
          %1136 = vnop
        $region56: #{decision_forward.1} parent=39 // pred_fallthru
          _
      $region40: #{decision_forward.1} parent=5 // pred_fallthru
        _
      %p1137 = scmp.le.s32.totalorder 2, %s15
      // Predicated region
      $region105: #{decision_forward.1} parent=5 // pred_check
        %p1138 = pneg %p1137
      $region106: #{decision_forward.1} parent=5 // pred_check_branch
        %1140 = sbr.rel (%p1138) target = $region108
      $region107: #{decision_forward.1} parent=5 // pred_region
        %s1141 = ssub.s32 %s15, 2
        // Predicated region
        $region109: #{decision_forward.1} parent=107 // pred_check
          %p1142 = pneg %p154
        $region110: #{decision_forward.1} parent=107 // pred_check_branch
          %1144 = sbr.rel (%p1142) target = $region112
        $region111: #{decision_forward.1} parent=107 // pred_region
          %s1145 = sand.u32 %s139, 1
          %s1146 = sand.u32 %s139, 1
          %s1147 = smul.addr %s1146, 128
          %s1148 = scalar_lea.vmem [#allocation7], %s1147
        $region112: #{decision_forward.1} parent=107 // pred_fallthru
          _
      $region108: #{decision_forward.1} parent=5 // pred_fallthru
        _
    $region6: #{decision_forward.1} parent=1 // loop_footer
      %s19 = sadd.s32 1, %s15
    $region7: #{decision_forward.1} parent=1 // loop_footer_branch
      %14 = sbr.rel target = $region3
    $region8: #{decision_forward.1} parent=1 // loop_exit
      _
    %1149 = vsyncpa [#allocation3], 1
    %s1150 = scalar_lea.sflag [#allocation3], 1
    %1151 = vsyncpa %s1150, 1
    %1152 = vsyncpa [#allocation5], 1

</llo_original>
